<compile_context>
chip_gen: v6e
topology: v6e:2x2x1
jax: 0.10.0
libtpu: 0.0.40
codegen_flags: <defaults>
</compile_context>

<pallas_src>
import functools

import jax
import jax.numpy as jnp
from jax import lax
from jax.experimental import pallas as pl
from jax.experimental.pallas import tpu as pltpu

_LANES = 128
_SUBLANES = 8
_DEFAULT_BLOCK_ROWS = 2048   # (2048, 128) f32 = 1 MiB per input per pipeline buffer


def _round_up(x, m):
    return ((x + m - 1) // m) * m


def _default_num_shards():
    """2 shards only on multi-TensorCore chips (v7x); 1 on v5e/v6e.

    On single-TC chips an extra shard only adds an extra accumulator init, a
    second grid dimension, and phantom clamped-block re-fetches.
    """
    try:
        kind = jax.devices()[0].device_kind.lower()
    except Exception:
        return 1
    return 2 if ("v7" in kind or "7x" in kind) else 1


def _wbce_kernel(x_ref, t_ref, *rest, block_rows, steps_per_shard, total_rows,
                 needs_mask, has_weight, focal_loss):
    if has_weight:
        w_ref, o_ref = rest
    else:
        (o_ref,) = rest

    s = pl.program_id(0)   # shard (parallel axis -> megacore on multi-TC chips)
    i = pl.program_id(1)   # step within shard (reduction axis)

    # Per-shard accumulator lives in the resident (1, 8, 128) output block.
    @pl.when(i == 0)
    def _():
        o_ref[...] = jnp.zeros_like(o_ref)

    # In-kernel upcast: callers may pass bf16 (halves DMA bytes; mem-bound win).
    x = x_ref[...].astype(jnp.float32)
    t = t_ref[...].astype(jnp.float32)

    # F.binary_cross_entropy clamps both log terms at -100.
    log_x = jnp.maximum(jnp.log(x), -100.0)
    log_1mx = jnp.maximum(jnp.log(1.0 - x), -100.0)
    # Un-negated BCE term, rewritten to save a mul + sub per element:
    #   t*log(x) + (1-t)*log(1-x) == log(1-x) + t*(log(x) - log(1-x))
    # The single global negation happens in the wrapper epilogue.
    term = log_1mx + t * (log_x - log_1mx)

    if focal_loss:
        # fl = clamp(x,0,1); fl[t==0] = 1-fl; fl = (1-fl)^2
        #   -> x^2 where t==0, (1-x)^2 elsewhere (one select + one mul).
        xc = jnp.clip(x, 0.0, 1.0)
        g = jnp.where(t == 0.0, xc, 1.0 - xc)
        w = g * g
        if has_weight:
            w = w * w_ref[...].astype(jnp.float32)
        term = term * w
    elif has_weight:
        term = term * w_ref[...].astype(jnp.float32)
    # (no-weight, non-focal variant skips the weight multiply entirely)

    def _accum(vals):
        # Block -> (8, 128) vreg-shaped partial with tile-aligned VPU adds.
        o_ref[0] += vals.reshape(-1, _SUBLANES, _LANES).sum(axis=0)

    if needs_mask:
        # Boundary-only masking: interior blocks take the unmasked fast path;
        # only blocks that straddle / exceed the end of the row range pay for
        # the iota + select.  Row-index compare only (no flat element ids), so
        # no int32 overflow even for multi-billion-element inputs.
        row_base = (s * steps_per_shard + i) * block_rows   # unclamped

        @pl.when(row_base + block_rows <= total_rows)
        def _():
            _accum(term)

        @pl.when(row_base + block_rows > total_rows)
        def _():
            row_ids = row_base + lax.broadcasted_iota(jnp.int32, term.shape, 0)
            _accum(jnp.where(row_ids < total_rows, term, 0.0))
    else:
        _accum(term)


def _bce_term_sum(x, t, w, focal_loss):
    """Sum of un-negated weighted BCE terms in plain JAX (used for the <128-elem tail)."""
    x = x.astype(jnp.float32)
    t = t.astype(jnp.float32)
    log_x = jnp.maximum(jnp.log(x), -100.0)
    log_1mx = jnp.maximum(jnp.log(1.0 - x), -100.0)
    term = log_1mx + t * (log_x - log_1mx)
    if focal_loss:
        xc = jnp.clip(x, 0.0, 1.0)
        g = jnp.where(t == 0.0, xc, 1.0 - xc)
        fw = g * g
        w = fw if w is None else fw * w.astype(jnp.float32)
    if w is not None:
        term = term * w.astype(jnp.float32)
    return jnp.sum(term)


@functools.partial(jax.jit,
                   static_argnames=("focal_loss", "block_rows", "num_shards"))
def weighted_bce(inp, target, weight=None, *, focal_loss=False,
                 block_rows=_DEFAULT_BLOCK_ROWS, num_shards=None):
    """Pallas TPU implementation of WeightedBCE.forward (reduction='mean').

    Notes:
      * weight=None (non-focal) is treated as an all-ones weight, without
        materializing / DMA'ing a ones tensor (2-input kernel variant).
        (The PyTorch module would raise in that case; focal weight=None uses
        the focal weight alone, exactly like the PyTorch code.)
      * bf16 inputs are encouraged for this memory-bound kernel (target is 0/1
        so lossless); the kernel upcasts to f32 in VMEM.
      * Each of the 1024 accumulator lanes sums ~total/1024 values sequentially
        in f32 - fine for a loss, but expect small (~1e-5 relative) drift vs an
        XLA tree-reduce for multi-billion-element inputs.
    """
    assert inp.shape == target.shape
    if weight is not None:
        assert weight.shape == inp.shape
    has_weight = weight is not None
    total = inp.size

    flat_x = inp.reshape(-1)
    flat_t = target.reshape(-1)
    flat_w = weight.reshape(-1) if has_weight else None

    # Lane-aligned prefix goes to the kernel; the (<128 element) remainder is
    # handled in plain JAX.  No whole-array jnp.pad, no ones tensor.
    aligned = (total // _LANES) * _LANES
    tail = total - aligned

    term_sum = jnp.float32(0.0)

    if aligned:
        rows = aligned // _LANES
        # For total % 128 == 0 (the common case) these slices cover the whole
        # array and the reshape is a free bitcast; for odd sizes XLA may
        # materialize the prefix copy (still far cheaper than padding all
        # arrays and shipping an extra ones weight through HBM).
        x2 = flat_x[:aligned].reshape(rows, _LANES)
        t2 = flat_t[:aligned].reshape(rows, _LANES)
        operands = [x2, t2]

        blk = min(block_rows, _round_up(rows, _SUBLANES))
        num_row_blocks = pl.cdiv(rows, blk)
        shards = _default_num_shards() if num_shards is None else num_shards
        shards = max(1, min(shards, num_row_blocks))
        steps = pl.cdiv(num_row_blocks, shards)
        needs_mask = (shards * steps * blk != rows)

        def in_map(s, i):
            # Clamp so phantom steps (shards * steps over-covering the row
            # blocks) re-read the last real block; the in-kernel mask zeroes
            # their contribution.
            return (jnp.minimum(s * steps + i, num_row_blocks - 1), 0)

        tile_spec = pl.BlockSpec((blk, _LANES), in_map)
        in_specs = [tile_spec, tile_spec]
        if has_weight:
            operands.append(flat_w[:aligned].reshape(rows, _LANES))
            in_specs.append(tile_spec)

        kernel = functools.partial(
            _wbce_kernel,
            block_rows=blk,
            steps_per_shard=steps,
            total_rows=rows,
            needs_mask=needs_mask,
            has_weight=has_weight,
            focal_loss=focal_loss,
        )

        partials = pl.pallas_call(
            kernel,
            out_shape=jax.ShapeDtypeStruct((shards, _SUBLANES, _LANES),
                                           jnp.float32),
            grid_spec=pltpu.PrefetchScalarGridSpec(
                num_scalar_prefetch=0,
                grid=(shards, steps),
                in_specs=in_specs,
                out_specs=pl.BlockSpec((1, _SUBLANES, _LANES),
                                       lambda s, i: (s, 0, 0)),
            ),
            # TODO(synk): on v7x, if xprof shows only one active TensorCore for
            # the "parallel" shard axis, switch it to pltpu.CORE_PARALLEL (or a
            # pl.core_map over pltpu.create_tensorcore_mesh).
            compiler_params=pltpu.CompilerParams(
                dimension_semantics=("parallel", "arbitrary"),
                vmem_limit_bytes=32 * 1024 * 1024),
        )(*operands)
        term_sum = term_sum + jnp.sum(partials)

    if tail:
        term_sum = term_sum + _bce_term_sum(
            flat_x[aligned:], flat_t[aligned:],
            None if flat_w is None else flat_w[aligned:], focal_loss)

    # Single global negation + mean (tiny epilogue, fused under jit).
    return -term_sum / jnp.float32(total)


def _reference(inp, target, weight=None, *, focal_loss=False):
    """Straightforward JAX port of the PyTorch module (independent formulation)."""
    x = inp.astype(jnp.float32)
    t = target.astype(jnp.float32)
    w = None if weight is None else weight.astype(jnp.float32)
    if focal_loss:
        fl = jnp.clip(x, 0.0, 1.0)
        fl = jnp.where(t == 0.0, 1.0 - fl, fl)
        fl = (1.0 - fl) ** 2
        w = fl if w is None else fl * w
    if w is None:
        w = jnp.ones_like(x)
    log_x = jnp.maximum(jnp.log(x), -100.0)
    log_1mx = jnp.maximum(jnp.log(1.0 - x), -100.0)
    return jnp.mean(-w * (t * log_x + (1.0 - t) * log_1mx))


def _make_inputs(key, shape):
    k1, k2, k3 = jax.random.split(key, 3)
    x = jax.nn.sigmoid(jax.random.normal(k1, shape, jnp.float32))
    t = jax.random.bernoulli(k2, 0.5, shape).astype(jnp.float32)
    w = jax.random.uniform(k3, shape, jnp.float32, minval=0.1, maxval=2.0)
    return x, t, w


if __name__ == "__main__":
    key = jax.random.PRNGKey(0)
    k_a, k_b, k_c = jax.random.split(key, 3)

    def check(actual, expected, name, rtol=2e-5, atol=1e-5):
        actual = jax.block_until_ready(actual)
        assert jnp.allclose(actual, expected, rtol=rtol, atol=atol), (
            name, actual, expected)

    # 1) Small NCHW case, lane-aligned (2*4*16*16 = 2048 elements).
    x, t, w = _make_inputs(k_a, (2, 4, 16, 16))
    check(weighted_bce(x, t, w), _reference(x, t, w), "small/weighted")
    check(weighted_bce(x, t, w, focal_loss=True),
          _reference(x, t, w, focal_loss=True), "small/weighted/focal")
    # bf16 inputs (kernel upcasts in VMEM).
    xb, tb, wb = (a.astype(jnp.bfloat16) for a in (x, t, w))
    check(weighted_bce(xb, tb, wb), _reference(xb, tb, wb), "small/bf16")

    # 2) Multi-block case (rows=3072 > block_rows=2048): interior fast path +
    #    boundary-only masked block; also the no-weight 2-input variant and an
    #    explicit 2-shard run (exercises the parallel/phantom-block path).
    x2, t2, w2 = _make_inputs(k_b, (4, 8, 96, 128))
    check(weighted_bce(x2, t2, w2), _reference(x2, t2, w2), "medium/weighted")
    check(weighted_bce(x2, t2), _reference(x2, t2), "medium/no-weight")
    check(weighted_bce(x2, t2, w2, num_shards=2), _reference(x2, t2, w2),
          "medium/2-shard")

    # 3) Odd-sized case (3*5*37*41 = 22755): <128-element tail handled in plain
    #    JAX, masked boundary block in the kernel, focal branch with and
    #    without an explicit weight.
    x3, t3, w3 = _make_inputs(k_c, (3, 5, 37, 41))
    check(weighted_bce(x3, t3, w3, focal_loss=True),
          _reference(x3, t3, w3, focal_loss=True), "odd/weighted/focal")
    check(weighted_bce(x3, t3, focal_loss=True),
          _reference(x3, t3, focal_loss=True), "odd/no-weight/focal")

    print("KERNEL_OK")
</pallas_src>

<mosaic_0001>
module attributes {stable_mosaic.version = 11 : i64} {
  func.func @_wbce_kernel(%arg0: i32, %arg1: i32, %arg2: memref<16x128xf32, #tpu.memory_space<vmem>>, %arg3: memref<16x128xf32, #tpu.memory_space<vmem>>, %arg4: memref<16x128xf32, #tpu.memory_space<vmem>>, %arg5: memref<1x8x128xf32, #tpu.memory_space<vmem>>) attributes {dimension_semantics = [#tpu.dimension_semantics<parallel>, #tpu.dimension_semantics<arbitrary>], iteration_bounds = array<i64: 1, 1>, scalar_prefetch = 0 : i64, scratch_operands = 0 : i64, tpu.core_type = #tpu.core_type<tc>, window_params = [{transform_indices = @transform_0, window_bounds = array<i64: 16, 128>}, {transform_indices = @transform_1, window_bounds = array<i64: 16, 128>}, {transform_indices = @transform_2, window_bounds = array<i64: 16, 128>}, {transform_indices = @transform_3, window_bounds = array<i64: 1, 8, 128>}]} {
    %c0_i32 = arith.constant 0 : i32
    %0 = arith.cmpi eq, %arg1, %c0_i32 : i32
    %1 = arith.extui %0 : i1 to i32
    %c0_i32_0 = arith.constant 0 : i32
    %2 = arith.cmpi ne, %1, %c0_i32_0 : i32
    scf.if %2 {
      %cst_15 = arith.constant 0.000000e+00 : f32
      %26 = vector.broadcast %cst_15 : f32 to vector<1x8x128xf32>
      %c0_16 = arith.constant 0 : index
      %c0_17 = arith.constant 0 : index
      %c0_18 = arith.constant 0 : index
      %27 = vector.load %arg5[%c0_16, %c0_17, %c0_18] : memref<1x8x128xf32, #tpu.memory_space<vmem>>, vector<1x8x128xf32>
      tpu.vector_store %arg5[%c0_16, %c0_17, %c0_18], %26 {strides = array<i32>} : memref<1x8x128xf32, #tpu.memory_space<vmem>>, vector<1x8x128xf32>,
    } else {
    }
    %c0 = arith.constant 0 : index
    %c0_1 = arith.constant 0 : index
    %3 = vector.load %arg2[%c0, %c0_1] : memref<16x128xf32, #tpu.memory_space<vmem>>, vector<16x128xf32>
    %c0_2 = arith.constant 0 : index
    %c0_3 = arith.constant 0 : index
    %4 = vector.load %arg3[%c0_2, %c0_3] : memref<16x128xf32, #tpu.memory_space<vmem>>, vector<16x128xf32>
    %5 = math.log %3 : vector<16x128xf32>
    %cst = arith.constant -1.000000e+02 : f32
    %6 = vector.broadcast %cst : f32 to vector<16x128xf32>
    %7 = arith.maximumf %5, %6 : vector<16x128xf32>
    %cst_4 = arith.constant 1.000000e+00 : f32
    %8 = vector.broadcast %cst_4 : f32 to vector<16x128xf32>
    %9 = arith.subf %8, %3 : vector<16x128xf32>
    %10 = math.log %9 : vector<16x128xf32>
    %cst_5 = arith.constant -1.000000e+02 : f32
    %11 = vector.broadcast %cst_5 : f32 to vector<16x128xf32>
    %12 = arith.maximumf %10, %11 : vector<16x128xf32>
    %13 = arith.subf %7, %12 : vector<16x128xf32>
    %14 = arith.mulf %4, %13 : vector<16x128xf32>
    %15 = arith.addf %12, %14 : vector<16x128xf32>
    %c0_6 = arith.constant 0 : index
    %c0_7 = arith.constant 0 : index
    %16 = vector.load %arg4[%c0_6, %c0_7] : memref<16x128xf32, #tpu.memory_space<vmem>>, vector<16x128xf32>
    %17 = arith.mulf %15, %16 : vector<16x128xf32>
    %c0_8 = arith.constant 0 : index
    %c0_9 = arith.constant 0 : index
    %c0_10 = arith.constant 0 : index
    %18 = vector.load %arg5[%c0_8, %c0_9, %c0_10] : memref<1x8x128xf32, #tpu.memory_space<vmem>>, vector<1x8x128xf32>
    %19 = vector.shape_cast %18 : vector<1x8x128xf32> to vector<8x128xf32>
    %20 = vector.shape_cast %17 : vector<16x128xf32> to vector<2x8x128xf32>
    %cst_11 = arith.constant dense<0.000000e+00> : vector<8x128xf32>
    %21 = vector.multi_reduction <add>, %20, %cst_11 [0] : vector<2x8x128xf32> to vector<8x128xf32>
    %22 = arith.addf %19, %21 : vector<8x128xf32>
    %c0_12 = arith.constant 0 : index
    %c0_13 = arith.constant 0 : index
    %c0_14 = arith.constant 0 : index
    %23 = vector.load %arg5[%c0_12, %c0_13, %c0_14] : memref<1x8x128xf32, #tpu.memory_space<vmem>>, vector<1x8x128xf32>
    %24 = vector.shape_cast %23 : vector<1x8x128xf32> to vector<8x128xf32>
    %25 = vector.shape_cast %22 : vector<8x128xf32> to vector<1x8x128xf32>
    tpu.vector_store %arg5[%c0_12, %c0_13, %c0_14], %25 {strides = array<i32>} : memref<1x8x128xf32, #tpu.memory_space<vmem>>, vector<1x8x128xf32>,
    return
  }
  func.func @transform_0(%arg0: i32, %arg1: i32) -> (i32, i32) {
    %c1_i32 = arith.constant 1 : i32
    %0 = arith.muli %arg0, %c1_i32 : i32
    %1 = arith.addi %0, %arg1 : i32
    %c0_i32 = arith.constant 0 : i32
    %2 = arith.minsi %1, %c0_i32 : i32
    %c0_i32_0 = arith.constant 0 : i32
    %c0_i32_1 = arith.constant 0 : i32
    return %2, %c0_i32_0 : i32, i32
  }
  func.func @transform_1(%arg0: i32, %arg1: i32) -> (i32, i32) {
    %c1_i32 = arith.constant 1 : i32
    %0 = arith.muli %arg0, %c1_i32 : i32
    %1 = arith.addi %0, %arg1 : i32
    %c0_i32 = arith.constant 0 : i32
    %2 = arith.minsi %1, %c0_i32 : i32
    %c0_i32_0 = arith.constant 0 : i32
    %c0_i32_1 = arith.constant 0 : i32
    return %2, %c0_i32_0 : i32, i32
  }
  func.func @transform_2(%arg0: i32, %arg1: i32) -> (i32, i32) {
    %c1_i32 = arith.constant 1 : i32
    %0 = arith.muli %arg0, %c1_i32 : i32
    %1 = arith.addi %0, %arg1 : i32
    %c0_i32 = arith.constant 0 : i32
    %2 = arith.minsi %1, %c0_i32 : i32
    %c0_i32_0 = arith.constant 0 : i32
    %c0_i32_1 = arith.constant 0 : i32
    return %2, %c0_i32_0 : i32, i32
  }
  func.func @transform_3(%arg0: i32, %arg1: i32) -> (i32, i32, i32) {
    %c0_i32 = arith.constant 0 : i32
    %c0_i32_0 = arith.constant 0 : i32
    %c0_i32_1 = arith.constant 0 : i32
    return %arg0, %c0_i32, %c0_i32_0 : i32, i32, i32
  }
}

</mosaic_0001>

<llo_original>
// kernel: weighted_bce.1
$region0: #{weighted_bce.1}
  #allocation0 [shape = 'u32[]', space=smem, size = 0x4, offset = 0x4, fixed_abs, tag = 'smem constant byte address 0x4 - core index']
  #allocation1 [shape = 'u32[144,128]{1,0:T(1,128)}', space=vmem, size = 0x12000, scoped, tag = 'internal scratch']
  %s0 = inlined_call_operand.vmem [shape: f32[16,128], index: 0, kind: input, shape index: {}]
  %s1 = inlined_call_operand.vmem [shape: f32[16,128], index: 1, kind: input, shape index: {}]
  %s2 = inlined_call_operand.vmem [shape: f32[16,128], index: 2, kind: input, shape index: {}]
  %s3 = inlined_call_operand.vmem [shape: f32[1,8,128], index: 3, kind: output, shape index: {}]
  %s4 = sld [smem:[#allocation0]]
  $region26: #{weighted_bce.1} parent=0
    _
  %s6 = ssub.s32 1, %s4
  %s7 = scalar_select 0, %s6, %s4
  // Predicated region
  $region2: #{weighted_bce.1} parent=0 // pred_check
    _
  $region3: #{weighted_bce.1} parent=0 // pred_check_branch
    %9 = sbr.rel (0) target = $region5
  $region4: #{weighted_bce.1} parent=0 // pred_region
    %s10 = sadd.s32 0, 0
    %p11 = scmp.lt.s32.totalorder %s10, 0
    %s12 = scalar_select %p11, %s10, 0
    %s13 = smul.u32 2, %s12
    %p14 = scmp.lt.s32.totalorder %s13, 1
    %s15 = scalar_select %p14, %s13, 1
    %s16 = smul.addr %s15, 8
    %s17 = scalar_lea.vmem %s0, %s16
    %s18 = sadd.s32 0, 0
    %p19 = scmp.lt.s32.totalorder %s18, 0
    %s20 = scalar_select %p19, %s18, 0
    %s21 = smul.u32 2, %s20
  $region5: #{weighted_bce.1} parent=0 // pred_fallthru
    _
  // Predicated region
  $region6: #{weighted_bce.1} parent=0 // pred_check
    _
  $region7: #{weighted_bce.1} parent=0 // pred_check_branch
    %23 = sbr.rel (0) target = $region9
  $region8: #{weighted_bce.1} parent=0 // pred_region
    %s24 = sadd.s32 0, 0
    %p25 = scmp.lt.s32.totalorder %s24, 0
    %s26 = scalar_select %p25, %s24, 0
    %s27 = smul.u32 2, %s26
    %p28 = scmp.lt.s32.totalorder %s27, 1
    %s29 = scalar_select %p28, %s27, 1
    %s30 = smul.addr %s29, 8
    %s31 = scalar_lea.vmem %s1, %s30
    %s32 = sadd.s32 0, 0
    %p33 = scmp.lt.s32.totalorder %s32, 0
    %s34 = scalar_select %p33, %s32, 0
    %s35 = smul.u32 2, %s34
  $region9: #{weighted_bce.1} parent=0 // pred_fallthru
    _
  // Predicated region
  $region10: #{weighted_bce.1} parent=0 // pred_check
    _
  $region11: #{weighted_bce.1} parent=0 // pred_check_branch
    %37 = sbr.rel (0) target = $region13
  $region12: #{weighted_bce.1} parent=0 // pred_region
    %s38 = sadd.s32 0, 0
    %p39 = scmp.lt.s32.totalorder %s38, 0
    %s40 = scalar_select %p39, %s38, 0
    %s41 = smul.u32 2, %s40
    %p42 = scmp.lt.s32.totalorder %s41, 1
    %s43 = scalar_select %p42, %s41, 1
    %s44 = smul.addr %s43, 8
    %s45 = scalar_lea.vmem %s2, %s44
    %s46 = sadd.s32 0, 0
    %p47 = scmp.lt.s32.totalorder %s46, 0
    %s48 = scalar_select %p47, %s46, 0
    %s49 = smul.u32 2, %s48
  $region13: #{weighted_bce.1} parent=0 // pred_fallthru
    _
  %s50 = sadd.s32 0, 0
  %p51 = scmp.lt.s32.totalorder %s50, 0
  %s52 = scalar_select %p51, %s50, 0
  %s53 = smul.u32 2, %s52
  %p54 = scmp.lt.s32.totalorder %s53, 1
  %s55 = scalar_select %p54, %s53, 1
  %s56 = smul.addr %s55, 8
  %s57 = scalar_lea.vmem %s0, %s56
  %s58 = sadd.s32 0, 0
  %p59 = scmp.lt.s32.totalorder %s58, 0
  %s60 = scalar_select %p59, %s58, 0
  %s61 = smul.u32 2, %s60
  %p62 = scmp.lt.s32.totalorder %s61, 1
  %s63 = scalar_select %p62, %s61, 1
  %s64 = smul.addr %s63, 8
  %s65 = scalar_lea.vmem %s1, %s64
  %s66 = sadd.s32 0, 0
  %p67 = scmp.lt.s32.totalorder %s66, 0
  %s68 = scalar_select %p67, %s66, 0
  %s69 = smul.u32 2, %s68
  %p70 = scmp.lt.s32.totalorder %s69, 1
  %s71 = scalar_select %p70, %s69, 1
  %s72 = smul.addr %s71, 8
  %s73 = scalar_lea.vmem %s2, %s72
  %s74 = sadd.s32 0, 0
  %p75 = scmp.lt.s32.totalorder %s74, 0
  %s76 = scalar_select %p75, %s74, 0
  %s77 = smul.u32 2, %s76
  %p78 = scmp.lt.s32.totalorder %s77, 1
  %s79 = scalar_select %p78, %s77, 1
  %s80 = smul.addr %s79, 8
  %s81 = scalar_lea.vmem %s0, %s80
  %s82 = sadd.s32 0, 0
  %p83 = scmp.lt.s32.totalorder %s82, 0
  %s84 = scalar_select %p83, %s82, 0
  %s85 = smul.u32 2, %s84
  %s86 = sadd.s32 0, 0
  %p87 = scmp.lt.s32.totalorder %s86, 0
  %s88 = scalar_select %p87, %s86, 0
  %s89 = smul.u32 2, %s88
  %p90 = scmp.lt.s32.totalorder %s89, 1
  %s91 = scalar_select %p90, %s89, 1
  %s92 = smul.addr %s91, 8
  %s93 = scalar_lea.vmem %s1, %s92
  %s94 = sadd.s32 0, 0
  %p95 = scmp.lt.s32.totalorder %s94, 0
  %s96 = scalar_select %p95, %s94, 0
  %s97 = smul.u32 2, %s96
  %s98 = sadd.s32 0, 0
  %p99 = scmp.lt.s32.totalorder %s98, 0
  %s100 = scalar_select %p99, %s98, 0
  %s101 = smul.u32 2, %s100
  %p102 = scmp.lt.s32.totalorder %s101, 1
  %s103 = scalar_select %p102, %s101, 1
  %s104 = smul.addr %s103, 8
  %s105 = scalar_lea.vmem %s2, %s104
  %s106 = sadd.s32 0, 0
  %p107 = scmp.lt.s32.totalorder %s106, 0
  %s108 = scalar_select %p107, %s106, 0
  %s109 = smul.u32 2, %s108
  %p110 = scmp.eq.s32.totalorder 0, 0
  // Predicated region
  $region14: #{weighted_bce.1} parent=0 // pred_check
    %p111 = pneg %p110
  $region15: #{weighted_bce.1} parent=0 // pred_check_branch
    %113 = sbr.rel (%p111) target = $region17
  $region16: #{weighted_bce.1} parent=0 // pred_region
    %114 = vst [vmem:[%s3] sm:$0xff] 0.0
  $region17: #{weighted_bce.1} parent=0 // pred_fallthru
    _
  %v115 = vld [vmem:[%s81] sm:$0xff]
  %v116 = vld [vmem:[%s81 + $0x8] sm:$0xff]
  %v117 = vld [vmem:[%s93] sm:$0xff]
  %v118 = vld [vmem:[%s93 + $0x8] sm:$0xff]
  %v119 = vlog2.pop %v115
  %v120 = vmul.f32 %v119, 0.6931472
  %v121 = vlog2.pop %v116
  %v122 = vmul.f32 %v121, 0.6931472
  %v123 = vmax.f32 %v120, -100.0
  %v124 = vmax.f32 %v122, -100.0
  %v125 = vsub.f32 1.0, %v115
  %v126 = vsub.f32 1.0, %v116
  %v127 = vlog2.pop %v125
  %v128 = vmul.f32 %v127, 0.6931472
  %v129 = vlog2.pop %v126
  %v130 = vmul.f32 %v129, 0.6931472
  %v131 = vmax.f32 %v128, -100.0
  %v132 = vmax.f32 %v130, -100.0
  %v133 = vsub.f32 %v123, %v131
  %v134 = vsub.f32 %v124, %v132
  %v135 = vmul.f32 %v117, %v133
  %v136 = vmul.f32 %v118, %v134
  %v137 = vadd.f32 %v131, %v135
  %v138 = vadd.f32 %v132, %v136
  %v139 = vld [vmem:[%s105] sm:$0xff]
  %v140 = vld [vmem:[%s105 + $0x8] sm:$0xff]
  %v141 = vmul.f32 %v137, %v139
  %v142 = vmul.f32 %v138, %v140
  %v143 = vld [vmem:[%s3] sm:$0xff]
  %v144 = vadd.f32 %v141, %v142
  %v145 = vadd.f32 %v143, %v144
  %146 = vst [vmem:[%s3] sm:$0xff] %v145
  // Predicated region
  $region18: #{weighted_bce.1} parent=0 // pred_check
    _
  $region19: #{weighted_bce.1} parent=0 // pred_check_branch
    %148 = sbr.rel (0) target = $region21
  $region20: #{weighted_bce.1} parent=0 // pred_region
    _
  $region21: #{weighted_bce.1} parent=0 // pred_fallthru
    _
  // Predicated region
  $region22: #{weighted_bce.1} parent=0 // pred_check
    _
  $region23: #{weighted_bce.1} parent=0 // pred_check_branch
    %150 = sbr.rel (0) target = $region25
  $region24: #{weighted_bce.1} parent=0 // pred_region
    _
  $region25: #{weighted_bce.1} parent=0 // pred_fallthru
    _

</llo_original>
